<compile_context>
chip_gen: v7x
topology: tpu7x:2x2x1
jax: 0.10.0
libtpu: 0.0.40
codegen_flags: <defaults>
</compile_context>

<pallas_src>
import math
import jax
import jax.numpy as jnp
from jax.experimental import pallas as pl
from jax.experimental.pallas import tpu as pltpu

_EPS = 1e-12  # F.normalize default eps


def _round_up(x, m):
    return ((x + m - 1) // m) * m


def _cosine_linear_kernel(sigma_ref, x_ref, w_ref, o_ref, acc_ref, xss_ref, wss_ref):
    # sigma_ref : SMEM (1,)  f32   -- sigma scale
    # x_ref     : VMEM (tm, tk)    -- raw input tile (native dtype)
    # w_ref     : VMEM (tn, tk)    -- raw weight tile (native dtype, (O, D) layout)
    # o_ref     : VMEM (tm, tn)    -- output tile
    # acc_ref   : VMEM (tm, tn) f32 -- matmul accumulator over k
    # xss_ref   : VMEM (tm, 1)  f32 -- sum(x^2) accumulator over k
    # wss_ref   : VMEM (1, tn)  f32 -- sum(w^2) accumulator over k
    k = pl.program_id(2)

    @pl.when(k == 0)
    def _init():
        acc_ref[...] = jnp.zeros_like(acc_ref)
        xss_ref[...] = jnp.zeros_like(xss_ref)
        wss_ref[...] = jnp.zeros_like(wss_ref)

    x = x_ref[...]                       # (tm, tk)
    w = w_ref[...]                       # (tn, tk)

    # Main matmul in the operands' native dtype (bf16 stays bf16), contracting
    # the last dims (no weight transpose through the XLU), f32 accumulation.
    acc_ref[...] += jax.lax.dot_general(
        x, w, dimension_numbers=(((1,), (1,)), ((), ())),
        preferred_element_type=jnp.float32)

    # Partial sum-of-squares of x rows: natural (tm, 1) orientation.
    # Independent of acc -> VPU/XLU work hides under the MXU.
    xf = x.astype(jnp.float32)
    xss_ref[...] += jnp.sum(xf * xf, axis=1, keepdims=True)

    # Partial sum-of-squares of W rows, produced directly in (1, tn) lane
    # orientation by a thin ones-matmul on the MXU (cost ~8/tm of the main
    # matmul); avoids a (tn,1)->(1,tn) transpose.
    wsq = w * w
    ones8 = jnp.ones((8, wsq.shape[1]), dtype=wsq.dtype)
    wss_ref[...] += jax.lax.dot_general(
        ones8, wsq, dimension_numbers=(((1,), (1,)), ((), ())),
        preferred_element_type=jnp.float32)[0:1, :]

    @pl.when(k == pl.num_programs(2) - 1)
    def _finalize():
        eps2 = jnp.float32(_EPS * _EPS)
        # 1 / max(||v||, eps) == rsqrt(max(sum_sq, eps^2)); sigma folded into x scale.
        x_scale = sigma_ref[0] * jax.lax.rsqrt(jnp.maximum(xss_ref[...], eps2))  # (tm, 1)
        w_scale = jax.lax.rsqrt(jnp.maximum(wss_ref[...], eps2))                 # (1, tn)
        o_ref[...] = (acc_ref[...] * x_scale * w_scale).astype(o_ref.dtype)


def cosine_linear(x, weight, sigma, *, tm=None, tn=None, tk=None):
    """x: (B, D); weight: (O, D); sigma: scalar (or None). Returns {'logits': (B, O)}."""
    B, D = x.shape
    O, D2 = weight.shape
    assert D == D2, "in_features mismatch"
    if sigma is None:
        sigma = 1.0
    out_dtype = x.dtype
    in_bytes = jnp.dtype(x.dtype).itemsize
    out_bytes = jnp.dtype(out_dtype).itemsize

    # --- VMEM budget / limit, re-derived per TPU generation (v7x: 64 MiB physical). ---
    try:
        phys_vmem = int(pltpu.get_tpu_info().vmem_capacity_bytes)
    except Exception:
        phys_vmem = 64 * 1024 * 1024          # conservative fallback (v7x per-core)
    vmem_limit = min(3 * phys_vmem // 4, 96 * 1024 * 1024)
    tile_budget = 3 * vmem_limit // 4

    # --- Tile sizes: dtype-aware sublane rounding; lane-dense (>=128) output tiles. ---
    sub = {4: 8, 2: 16, 1: 32}.get(in_bytes, 8)
    if tm is None:
        tm = min(_round_up(B, sub), 256)       # batch tile (raise further for huge B)
    if tn is None:
        o128 = _round_up(O, 128)
        tn = o128 if o128 <= 256 else min(_round_up(O, 256), 512)

    # --- K (in_features) tile: as big as the VMEM budget allows, multiple of 128. ---
    if tk is None:
        fixed = (2 * tm * tn * out_bytes          # double-buffered output blocks
                 + tm * tn * 4                    # f32 accumulator scratch
                 + (tm + 8) * 128 * 4)            # small norm scratches (padded)
        per_k = 2 * (tm + tn) * in_bytes          # double-buffered x & W tiles per unit tk
        tk_cap = max(128, ((tile_budget - fixed) // per_k) // 128 * 128)
        tk = min(_round_up(D, 128), tk_cap)

    Bp, Op, Dp = _round_up(B, tm), _round_up(O, tn), _round_up(D, tk)
    kt = Dp // tk

    # Zero padding is exact: padded columns add 0 to dots and norms; padded rows
    # give acc==0 so 0 * (1/eps) == 0 and are sliced away below.
    if (Bp, Dp) != (B, D):
        x = jnp.pad(x, ((0, Bp - B), (0, Dp - D)))
    if (Op, Dp) != (O, D):
        weight = jnp.pad(weight, ((0, Op - O), (0, Dp - D)))

    sigma_arr = jnp.asarray(sigma, dtype=jnp.float32).reshape((1,))

    # --- Grid order: re-stream whichever operand costs less total HBM traffic. ---
    if (Bp // tm) * Op <= (Op // tn) * Bp:
        # O >> B (classifier head): x stays resident per batch block, W streams.
        grid = (Bp // tm, Op // tn, kt)
        xmap = lambda i, j, k: (i, k)
        wmap = lambda i, j, k: (j, k)
        omap = lambda i, j, k: (i, j)
    else:
        # B >> O: W stays resident per out block, x streams.
        grid = (Op // tn, Bp // tm, kt)
        xmap = lambda j, i, k: (i, k)
        wmap = lambda j, i, k: (j, k)
        omap = lambda j, i, k: (i, j)

    cost = pl.CostEstimate(
        flops=2 * Bp * Op * Dp,
        transcendentals=Bp + Op,
        bytes_accessed=(Bp * Dp + Op * Dp) * in_bytes + Bp * Op * out_bytes)

    out = pl.pallas_call(
        _cosine_linear_kernel,
        out_shape=jax.ShapeDtypeStruct((Bp, Op), out_dtype),
        grid_spec=pltpu.PrefetchScalarGridSpec(
            num_scalar_prefetch=0,
            grid=grid,
            in_specs=[
                pl.BlockSpec(memory_space=pltpu.MemorySpace.SMEM),  # sigma (1,)
                pl.BlockSpec((tm, tk), xmap),                       # x tile
                pl.BlockSpec((tn, tk), wmap),                       # W tile
            ],
            out_specs=pl.BlockSpec((tm, tn), omap),
            scratch_shapes=[
                pltpu.VMEM((tm, tn), jnp.float32),   # matmul accumulator
                pltpu.VMEM((tm, 1), jnp.float32),    # sum(x^2)
                pltpu.VMEM((1, tn), jnp.float32),    # sum(w^2)
            ],
        ),
        compiler_params=pltpu.CompilerParams(
            dimension_semantics=("parallel", "parallel", "arbitrary"),
            vmem_limit_bytes=vmem_limit),
        cost_estimate=cost,
    )(sigma_arr, x, weight)

    return {"logits": out[:B, :O]}


def init_cosine_linear_params(key, in_features, out_features, nb_proxy=1):
    """Deterministic init mirroring CosineLinear.reset_parameters()."""
    total_out = out_features * nb_proxy
    stdv = 1.0 / math.sqrt(in_features)
    weight = jax.random.uniform(
        key, (total_out, in_features), dtype=jnp.float32,
        minval=-stdv, maxval=stdv)
    sigma = jnp.float32(1.0)  # sigma.data.fill_(1)
    return weight, sigma


def _reference(x, weight, sigma):
    xf = x.astype(jnp.float32)
    wf = weight.astype(jnp.float32)
    xn = xf / jnp.maximum(jnp.linalg.norm(xf, axis=1, keepdims=True), _EPS)
    wn = wf / jnp.maximum(jnp.linalg.norm(wf, axis=1, keepdims=True), _EPS)
    return (sigma * (xn @ wn.T)).astype(x.dtype)


if __name__ == "__main__":
    key = jax.random.PRNGKey(0)
    k_w, k_x = jax.random.split(key)

    batch = 8
    in_features = 32
    out_features = 16
    nb_proxy = 1

    weight, sigma = init_cosine_linear_params(k_w, in_features, out_features, nb_proxy)
    x = jax.random.normal(k_x, (batch, in_features), dtype=jnp.float32)

    out = cosine_linear(x, weight, sigma)
    logits = jax.block_until_ready(out["logits"])

    ref = _reference(x, weight, sigma)
    assert logits.shape == (batch, out_features * nb_proxy)
    assert jnp.allclose(logits, ref, atol=1e-4, rtol=1e-4), "mismatch vs reference"

    print("KERNEL_OK")
</pallas_src>

<mosaic_0001>
module attributes {stable_mosaic.version = 11 : i64} {
  func.func @_cosine_linear_kernel(%arg0: i32, %arg1: i32, %arg2: i32, %arg3: memref<1xf32, #tpu.memory_space<smem>>, %arg4: memref<8x128xf32, #tpu.memory_space<vmem>>, %arg5: memref<128x128xf32, #tpu.memory_space<vmem>>, %arg6: memref<8x128xf32, #tpu.memory_space<vmem>>, %arg7: memref<8x128xf32, #tpu.memory_space<vmem>>, %arg8: memref<8x1xf32, #tpu.memory_space<vmem>>, %arg9: memref<1x128xf32, #tpu.memory_space<vmem>>) attributes {dimension_semantics = [#tpu.dimension_semantics<parallel>, #tpu.dimension_semantics<parallel>, #tpu.dimension_semantics<arbitrary>], iteration_bounds = array<i64: 1, 1, 1>, scalar_prefetch = 0 : i64, scratch_operands = 3 : i64, tpu.core_type = #tpu.core_type<tc>, window_params = [{transform_indices = @transform_0, window_bounds = array<i64: 1>}, {transform_indices = @transform_1, window_bounds = array<i64: 8, 128>}, {transform_indices = @transform_2, window_bounds = array<i64: 128, 128>}, {transform_indices = @transform_3, window_bounds = array<i64: 8, 128>}]} {
    %c0_i32 = arith.constant 0 : i32
    %0 = arith.cmpi eq, %arg2, %c0_i32 : i32
    %1 = arith.extui %0 : i1 to i32
    %c0_i32_0 = arith.constant 0 : i32
    %2 = arith.cmpi ne, %1, %c0_i32_0 : i32
    scf.if %2 {
      %cst_21 = arith.constant 0.000000e+00 : f32
      %25 = vector.broadcast %cst_21 : f32 to vector<8x128xf32>
      %c0_22 = arith.constant 0 : index
      %c0_23 = arith.constant 0 : index
      %26 = vector.load %arg7[%c0_22, %c0_23] : memref<8x128xf32, #tpu.memory_space<vmem>>, vector<8x128xf32>
      tpu.vector_store %arg7[%c0_22, %c0_23], %25 {strides = array<i32>} : memref<8x128xf32, #tpu.memory_space<vmem>>, vector<8x128xf32>,
      %cst_24 = arith.constant 0.000000e+00 : f32
      %27 = vector.broadcast %cst_24 : f32 to vector<8x1xf32>
      %c0_25 = arith.constant 0 : index
      %c0_26 = arith.constant 0 : index
      %28 = vector.load %arg8[%c0_25, %c0_26] : memref<8x1xf32, #tpu.memory_space<vmem>>, vector<8x1xf32>
      tpu.vector_store %arg8[%c0_25, %c0_26], %27 {strides = array<i32>} : memref<8x1xf32, #tpu.memory_space<vmem>>, vector<8x1xf32>,
      %cst_27 = arith.constant 0.000000e+00 : f32
      %29 = vector.broadcast %cst_27 : f32 to vector<1x128xf32>
      %c0_28 = arith.constant 0 : index
      %c0_29 = arith.constant 0 : index
      %30 = vector.load %arg9[%c0_28, %c0_29] : memref<1x128xf32, #tpu.memory_space<vmem>>, vector<1x128xf32>
      tpu.vector_store %arg9[%c0_28, %c0_29], %29 {strides = array<i32>} : memref<1x128xf32, #tpu.memory_space<vmem>>, vector<1x128xf32>,
    } else {
    }
    %c0 = arith.constant 0 : index
    %c0_1 = arith.constant 0 : index
    %3 = vector.load %arg4[%c0, %c0_1] : memref<8x128xf32, #tpu.memory_space<vmem>>, vector<8x128xf32>
    %c0_2 = arith.constant 0 : index
    %c0_3 = arith.constant 0 : index
    %4 = vector.load %arg5[%c0_2, %c0_3] : memref<128x128xf32, #tpu.memory_space<vmem>>, vector<128x128xf32>
    %c0_4 = arith.constant 0 : index
    %c0_5 = arith.constant 0 : index
    %5 = vector.load %arg7[%c0_4, %c0_5] : memref<8x128xf32, #tpu.memory_space<vmem>>, vector<8x128xf32>
    %cst = arith.constant dense<0.000000e+00> : vector<8x128xf32>
    %6 = tpu.matmul %3, %4, %cst {dimension_numbers = #tpu.dot_dimension_numbers<[1], [1], [0], [0], [0, 0, 1, 0], [], []>} : vector<8x128xf32>, vector<128x128xf32>, vector<8x128xf32> -> vector<8x128xf32>
    %7 = arith.addf %5, %6 : vector<8x128xf32>
    %c0_6 = arith.constant 0 : index
    %c0_7 = arith.constant 0 : index
    %8 = vector.load %arg7[%c0_6, %c0_7] : memref<8x128xf32, #tpu.memory_space<vmem>>, vector<8x128xf32>
    tpu.vector_store %arg7[%c0_6, %c0_7], %7 {strides = array<i32>} : memref<8x128xf32, #tpu.memory_space<vmem>>, vector<8x128xf32>,
    %c0_8 = arith.constant 0 : index
    %c0_9 = arith.constant 0 : index
    %9 = vector.load %arg8[%c0_8, %c0_9] : memref<8x1xf32, #tpu.memory_space<vmem>>, vector<8x1xf32>
    %10 = arith.mulf %3, %3 : vector<8x128xf32>
    %cst_10 = arith.constant dense<0.000000e+00> : vector<8xf32>
    %11 = vector.multi_reduction <add>, %10, %cst_10 [1] : vector<8x128xf32> to vector<8xf32>
    %12 = vector.shape_cast %11 : vector<8xf32> to vector<8x1xf32>
    %13 = arith.addf %9, %12 : vector<8x1xf32>
    %c0_11 = arith.constant 0 : index
    %c0_12 = arith.constant 0 : index
    %14 = vector.load %arg8[%c0_11, %c0_12] : memref<8x1xf32, #tpu.memory_space<vmem>>, vector<8x1xf32>
    tpu.vector_store %arg8[%c0_11, %c0_12], %13 {strides = array<i32>} : memref<8x1xf32, #tpu.memory_space<vmem>>, vector<8x1xf32>,
    %15 = arith.mulf %4, %4 : vector<128x128xf32>
    %cst_13 = arith.constant 1.000000e+00 : f32
    %16 = vector.broadcast %cst_13 : f32 to vector<8x128xf32>
    %c0_14 = arith.constant 0 : index
    %c0_15 = arith.constant 0 : index
    %17 = vector.load %arg9[%c0_14, %c0_15] : memref<1x128xf32, #tpu.memory_space<vmem>>, vector<1x128xf32>
    %cst_16 = arith.constant dense<0.000000e+00> : vector<8x128xf32>
    %18 = tpu.matmul %16, %15, %cst_16 {dimension_numbers = #tpu.dot_dimension_numbers<[1], [1], [0], [0], [0, 0, 1, 0], [], []>} : vector<8x128xf32>, vector<128x128xf32>, vector<8x128xf32> -> vector<8x128xf32>
    %19 = vector.extract_strided_slice %18 {offsets = [0, 0], sizes = [1, 128], strides = [1, 1]} : vector<8x128xf32> to vector<1x128xf32>
    %20 = arith.addf %17, %19 : vector<1x128xf32>
    %c0_17 = arith.constant 0 : index
    %c0_18 = arith.constant 0 : index
    %21 = vector.load %arg9[%c0_17, %c0_18] : memref<1x128xf32, #tpu.memory_space<vmem>>, vector<1x128xf32>
    tpu.vector_store %arg9[%c0_17, %c0_18], %20 {strides = array<i32>} : memref<1x128xf32, #tpu.memory_space<vmem>>, vector<1x128xf32>,
    %c0_i32_19 = arith.constant 0 : i32
    %22 = arith.cmpi eq, %arg2, %c0_i32_19 : i32
    %23 = arith.extui %22 : i1 to i32
    %c0_i32_20 = arith.constant 0 : i32
    %24 = arith.cmpi ne, %23, %c0_i32_20 : i32
    scf.if %24 {
      %c0_21 = arith.constant 0 : index
      %25 = memref.load %arg3[%c0_21] : memref<1xf32, #tpu.memory_space<smem>>
      %c0_22 = arith.constant 0 : index
      %c0_23 = arith.constant 0 : index
      %26 = vector.load %arg8[%c0_22, %c0_23] : memref<8x1xf32, #tpu.memory_space<vmem>>, vector<8x1xf32>
      %cst_24 = arith.constant 1.000000e-24 : f32
      %27 = vector.broadcast %cst_24 : f32 to vector<8x1xf32>
      %28 = arith.maximumf %26, %27 : vector<8x1xf32>
      %29 = math.rsqrt %28 : vector<8x1xf32>
      %30 = vector.broadcast %25 : f32 to vector<8x1xf32>
      %31 = arith.mulf %30, %29 : vector<8x1xf32>
      %c0_25 = arith.constant 0 : index
      %c0_26 = arith.constant 0 : index
      %32 = vector.load %arg9[%c0_25, %c0_26] : memref<1x128xf32, #tpu.memory_space<vmem>>, vector<1x128xf32>
      %cst_27 = arith.constant 1.000000e-24 : f32
      %33 = vector.broadcast %cst_27 : f32 to vector<1x128xf32>
      %34 = arith.maximumf %32, %33 : vector<1x128xf32>
      %35 = math.rsqrt %34 : vector<1x128xf32>
      %c0_28 = arith.constant 0 : index
      %c0_29 = arith.constant 0 : index
      %36 = vector.load %arg7[%c0_28, %c0_29] : memref<8x128xf32, #tpu.memory_space<vmem>>, vector<8x128xf32>
      %37 = vector.broadcast %31 : vector<8x1xf32> to vector<8x128xf32>
      %38 = arith.mulf %36, %37 : vector<8x128xf32>
      %39 = vector.broadcast %35 : vector<1x128xf32> to vector<8x128xf32>
      %40 = arith.mulf %38, %39 : vector<8x128xf32>
      %c0_30 = arith.constant 0 : index
      %c0_31 = arith.constant 0 : index
      %41 = vector.load %arg6[%c0_30, %c0_31] : memref<8x128xf32, #tpu.memory_space<vmem>>, vector<8x128xf32>
      tpu.vector_store %arg6[%c0_30, %c0_31], %40 {strides = array<i32>} : memref<8x128xf32, #tpu.memory_space<vmem>>, vector<8x128xf32>,
    } else {
    }
    return
  }
  func.func @transform_0(%arg0: i32, %arg1: i32, %arg2: i32) -> i32 {
    %c0_i32 = arith.constant 0 : i32
    %c0_i32_0 = arith.constant 0 : i32
    return %c0_i32 : i32
  }
  func.func @transform_1(%arg0: i32, %arg1: i32, %arg2: i32) -> (i32, i32) {
    %c0_i32 = arith.constant 0 : i32
    return %arg1, %arg2 : i32, i32
  }
  func.func @transform_2(%arg0: i32, %arg1: i32, %arg2: i32) -> (i32, i32) {
    %c0_i32 = arith.constant 0 : i32
    return %arg0, %arg2 : i32, i32
  }
  func.func @transform_3(%arg0: i32, %arg1: i32, %arg2: i32) -> (i32, i32) {
    %c0_i32 = arith.constant 0 : i32
    return %arg1, %arg0 : i32, i32
  }
}

</mosaic_0001>

<llo_original>
// kernel: tpu_custom_call.1
$region0: #{tpu_custom_call.1}
  #allocation0 [shape = 'u32[]', space=smem, size = 0x4, offset = 0x4, fixed_abs, tag = 'smem constant byte address 0x4 - core index']
  #allocation1 [shape = 'u32[144,128]{1,0:T(1,128)}', space=vmem, size = 0x12000, scoped, tag = 'internal scratch']
  #allocation2 [shape = 'f32[8,128]{1,0:T(8,128)}', space=vmem, size = 0x1000, scoped, tag = 'scratch operand']
  #allocation3 [shape = 'f32[8,1]{1,0:T(8,128)}', space=vmem, size = 0x1000, scoped, tag = 'scratch operand']
  #allocation4 [shape = 'f32[1,128]{1,0:T(1,128)}', space=vmem, size = 0x200, scoped, tag = 'scratch operand']
  #allocation5 [shape = 'f32[1]{0:T(128)S(6)}', space=smem, size = 0x200, scoped, tag = 'scoped memory for tpu_custom_call.1']
  %s0 = inlined_call_operand.<no memory space> [shape: f32[1], index: 0, kind: input, shape index: {}]
  %s1 = inlined_call_operand.hbm [shape: f32[8,128], index: 1, kind: input, shape index: {}]
  %s2 = inlined_call_operand.hbm [shape: f32[128,128], index: 2, kind: input, shape index: {}]
  %s3 = inlined_call_operand.hbm [shape: f32[8,128], index: 3, kind: output, shape index: {}]
  %s4 = sld [smem:[#allocation0]]
  $region38: #{tpu_custom_call.1} parent=0
    _
  %s6 = ssub.s32 1, %s4
  %s7 = scalar_select 0, %s6, %s4
  %8 = sst [smem:[#allocation5]] %s0
  $region1: #{tpu_custom_call.1} parent=0
    #allocation6 [shape = 'u8[4096]{0}', space=vmem, size = 0x1000, scoped, tag = 'input window, operand 1, single buffered']
    #allocation7 [shape = 's32[1]{0}', space=sflag, size = 0x4, scoped, tag = 'scoped memory for tpu_custom_call.1']
    #allocation8 [shape = 's32[1]{0}', space=sflag, size = 0x4, scoped, tag = 'scoped memory for tpu_custom_call.1']
    #allocation9 [shape = 'u8[65536]{0}', space=vmem, size = 0x10000, scoped, tag = 'input window, operand 2, single buffered']
    #allocation10 [shape = 's32[1]{0}', space=sflag, size = 0x4, scoped, tag = 'scoped memory for tpu_custom_call.1']
    #allocation11 [shape = 'u8[4096]{0}', space=vmem, size = 0x1000, scoped, tag = 'output window, operand 0, single buffered']
    %9 = vsyncpa [#allocation7], 0
    %10 = vsyncpa [#allocation10], 0
    %11 = vsyncpa [#allocation8], 0
    // Predicated region
    $region2: #{tpu_custom_call.1} parent=1 // pred_check
      _
    $region3: #{tpu_custom_call.1} parent=1 // pred_check_branch
      %13 = sbr.rel (0) target = $region5
    $region4: #{tpu_custom_call.1} parent=1 // pred_region
      _
    $region5: #{tpu_custom_call.1} parent=1 // pred_fallthru
      _
    // Predicated region
    $region6: #{tpu_custom_call.1} parent=1 // pred_check
      _
    $region7: #{tpu_custom_call.1} parent=1 // pred_check_branch
      %15 = sbr.rel (0) target = $region9
    $region8: #{tpu_custom_call.1} parent=1 // pred_region
      %s17 = ssub.s32 128, 128
      %18 = vsyncadd [#allocation7], %s17
      %s20 = sshll.u32 [#allocation6], 4
      %s21 = int_to_ptr.vmem [resolvable:$true] %s20
      %23 = dma.hbm_to_vmem [thread:$0]  %s1, 128, %s21, [#allocation7]
    $region9: #{tpu_custom_call.1} parent=1 // pred_fallthru
      _
    // Predicated region
    $region10: #{tpu_custom_call.1} parent=1 // pred_check
      _
    $region11: #{tpu_custom_call.1} parent=1 // pred_check_branch
      %25 = sbr.rel (0) target = $region13
    $region12: #{tpu_custom_call.1} parent=1 // pred_region
      %s27 = ssub.s32 2048, 2048
      %28 = vsyncadd [#allocation10], %s27
      %s29 = sshll.u32 [#allocation9], 4
      %s30 = int_to_ptr.vmem [resolvable:$true] %s29
      %35 = dma.hbm_to_vmem [thread:$0]  %s2, 2048, %s30, [#allocation10], 128, 128, 8
    $region13: #{tpu_custom_call.1} parent=1 // pred_fallthru
      _
    // Predicated region
    $region14: #{tpu_custom_call.1} parent=1 // pred_check
      _
    $region15: #{tpu_custom_call.1} parent=1 // pred_check_branch
      %37 = sbr.rel (0) target = $region17
    $region16: #{tpu_custom_call.1} parent=1 // pred_region
      %38 = dma.done [#allocation7], 128
    $region17: #{tpu_custom_call.1} parent=1 // pred_fallthru
      _
    // Predicated region
    $region18: #{tpu_custom_call.1} parent=1 // pred_check
      _
    $region19: #{tpu_custom_call.1} parent=1 // pred_check_branch
      %40 = sbr.rel (0) target = $region21
    $region20: #{tpu_custom_call.1} parent=1 // pred_region
      %41 = dma.done [#allocation10], 2048
    $region21: #{tpu_custom_call.1} parent=1 // pred_fallthru
      _
    %p42 = scmp.eq.s32.totalorder 0, 0
    // Predicated region
    $region22: #{tpu_custom_call.1} parent=1 // pred_check
      %p43 = pneg %p42
    $region23: #{tpu_custom_call.1} parent=1 // pred_check_branch
      %45 = sbr.rel (%p43) target = $region25
    $region24: #{tpu_custom_call.1} parent=1 // pred_region
      %46 = vst [vmem:[#allocation2] sm:$0xff] 0.0
      %vm47 = vcmask 7168
      %48 = vst.msk [vmem:[#allocation3] sm:$0xff] %vm47, 0.0
      %49 = vst [vmem:[#allocation4] sm:$0x1] 0.0
    $region25: #{tpu_custom_call.1} parent=1 // pred_fallthru
      _
    %v50 = vld [vmem:[#allocation6] sm:$0xff]
    %v51 = vld [vmem:[#allocation9] sm:$0xff]
    %v52 = vld [vmem:[#allocation9 + $0x8] sm:$0xff]
    %v53 = vld [vmem:[#allocation9 + $0x10] sm:$0xff]
    %v54 = vld [vmem:[#allocation9 + $0x18] sm:$0xff]
    %v55 = vld [vmem:[#allocation9 + $0x20] sm:$0xff]
    %v56 = vld [vmem:[#allocation9 + $0x28] sm:$0xff]
    %v57 = vld [vmem:[#allocation9 + $0x30] sm:$0xff]
    %v58 = vld [vmem:[#allocation9 + $0x38] sm:$0xff]
    %v59 = vld [vmem:[#allocation9 + $0x40] sm:$0xff]
    %v60 = vld [vmem:[#allocation9 + $0x48] sm:$0xff]
    %v61 = vld [vmem:[#allocation9 + $0x50] sm:$0xff]
    %v62 = vld [vmem:[#allocation9 + $0x58] sm:$0xff]
    %v63 = vld [vmem:[#allocation9 + $0x60] sm:$0xff]
    %v64 = vld [vmem:[#allocation9 + $0x68] sm:$0xff]
    %v65 = vld [vmem:[#allocation9 + $0x70] sm:$0xff]
    %v66 = vld [vmem:[#allocation9 + $0x78] sm:$0xff]
    %v67 = vld [vmem:[#allocation2] sm:$0xff]
    %68 = vmatprep.subr.mxu0 0.0
    %69 = vmatpush1.xpose.msra.mxu0 %v51
    %70 = vmatprep.subr.mxu0 0.0
    %71 = vmatpush1.xpose.msra.mxu0 %v52
    %72 = vmatprep.subr.mxu0 0.0
    %73 = vmatpush1.xpose.msra.mxu0 %v53
    %74 = vmatprep.subr.mxu0 0.0
    %75 = vmatpush1.xpose.msra.mxu0 %v54
    %76 = vmatprep.subr.mxu0 0.0
    %77 = vmatpush1.xpose.msra.mxu0 %v55
    %78 = vmatprep.subr.mxu0 0.0
    %79 = vmatpush1.xpose.msra.mxu0 %v56
    %80 = vmatprep.subr.mxu0 0.0
    %81 = vmatpush1.xpose.msra.mxu0 %v57
    %82 = vmatprep.subr.mxu0 0.0
    %83 = vmatpush1.xpose.msra.mxu0 %v58
    %84 = vmatprep.subr.mxu0 0.0
    %85 = vmatpush1.xpose.msra.mxu0 %v59
    %86 = vmatprep.subr.mxu0 0.0
    %87 = vmatpush1.xpose.msra.mxu0 %v60
    %88 = vmatprep.subr.mxu0 0.0
    %89 = vmatpush1.xpose.msra.mxu0 %v61
    %90 = vmatprep.subr.mxu0 0.0
    %91 = vmatpush1.xpose.msra.mxu0 %v62
    %92 = vmatprep.subr.mxu0 0.0
    %93 = vmatpush1.xpose.msra.mxu0 %v63
    %94 = vmatprep.subr.mxu0 0.0
    %95 = vmatpush1.xpose.msra.mxu0 %v64
    %96 = vmatprep.subr.mxu0 0.0
    %97 = vmatpush1.xpose.msra.mxu0 %v65
    %98 = vmatprep.subr.mxu0 0.0
    %99 = vmatpush1.xpose.msra.mxu0 %v66
    %100 = vmatprep.subr.mxu0 0.0
    %101 = vmatpush1.xpose.msra.mxu0 0.0
    %102 = vmatprep.subr.mxu0 0.0
    %103 = vmatpush1.xpose.msra.mxu0 0.0
    %104 = vmatprep.subr.mxu0 0.0
    %105 = vmatpush1.xpose.msra.mxu0 0.0
    %106 = vmatprep.subr.mxu0 0.0
    %107 = vmatpush1.xpose.msra.mxu0 0.0
    %108 = vmatprep.subr.mxu0 0.0
    %109 = vmatpush1.xpose.msra.mxu0 0.0
    %110 = vmatprep.subr.mxu0 0.0
    %111 = vmatpush1.xpose.msra.mxu0 0.0
    %112 = vmatprep.subr.mxu0 0.0
    %113 = vmatpush1.xpose.msra.mxu0 0.0
    %114 = vmatprep.subr.mxu0 0.0
    %115 = vmatpush1.xpose.msra.mxu0 0.0
    %116 = vmatprep.subr.mxu0 0.0
    %117 = vmatpush1.xpose.msra.mxu0 0.0
    %118 = vmatprep.subr.mxu0 0.0
    %119 = vmatpush1.xpose.msra.mxu0 0.0
    %120 = vmatprep.subr.mxu0 0.0
    %121 = vmatpush1.xpose.msra.mxu0 0.0
    %122 = vmatprep.subr.mxu0 0.0
    %123 = vmatpush1.xpose.msra.mxu0 0.0
    %124 = vmatprep.subr.mxu0 0.0
    %125 = vmatpush1.xpose.msra.mxu0 0.0
    %126 = vmatprep.subr.mxu0 0.0
    %127 = vmatpush1.xpose.msra.mxu0 0.0
    %128 = vmatprep.subr.mxu0 0.0
    %129 = vmatpush1.xpose.msra.mxu0 0.0
    %130 = vmatprep.subr.mxu0 0.0
    %131 = vmatpush1.xpose.msra.mxu0 0.0
    %132 = vmatprep.mubr.f32.mxu0 0.0
    %133 = vmatmul.mubr.f32.gmra.mrb[0].mxu0 %v50
    %v134 = vpop.f32.mrb[0].mxu0
    %v135 = vadd.f32 0.0, %v134
    %v136 = vpop.f32.mrb[0].mxu0
    %137 = vdwg.mxu0
    %v138 = vadd.f32 %v67, %v135
    %139 = vst [vmem:[#allocation2] sm:$0xff] %v138
    %v140 = vld [vmem:[#allocation3] sm:$0xff]
    %v141 = vmul.f32 %v50, %v50
    %142 = vadd.xlane.f32.xlu0 %v141
    %v143 = vpop.xlane.xlu0 %142
    %v144 = vadd.f32 %v140, %v143
    %vm145 = vcmask 7168
    %146 = vst.msk [vmem:[#allocation3] sm:$0xff] %vm145, %v144
    %v147 = vmul.f32 %v51, %v51
    %v148 = vmul.f32 %v52, %v52
    %v149 = vmul.f32 %v53, %v53
    %v150 = vmul.f32 %v54, %v54
    %v151 = vmul.f32 %v55, %v55
    %v152 = vmul.f32 %v56, %v56
    %v153 = vmul.f32 %v57, %v57
    %v154 = vmul.f32 %v58, %v58
    %v155 = vmul.f32 %v59, %v59
    %v156 = vmul.f32 %v60, %v60
    %v157 = vmul.f32 %v61, %v61
    %v158 = vmul.f32 %v62, %v62
    %v159 = vmul.f32 %v63, %v63
    %v160 = vmul.f32 %v64, %v64
    %v161 = vmul.f32 %v65, %v65
    %v162 = vmul.f32 %v66, %v66
    %v163 = vld [vmem:[#allocation4] sm:$0x1]
    %164 = vmatprep.subr.mxu0 0.0
    %165 = vmatpush1.xpose.msra.mxu0 %v147
    %166 = vmatprep.subr.mxu0 0.0
    %167 = vmatpush1.xpose.msra.mxu0 %v148
    %168 = vmatprep.subr.mxu0 0.0
    %169 = vmatpush1.xpose.msra.mxu0 %v149
    %170 = vmatprep.subr.mxu0 0.0
    %171 = vmatpush1.xpose.msra.mxu0 %v150
    %172 = vmatprep.subr.mxu0 0.0
    %173 = vmatpush1.xpose.msra.mxu0 %v151
    %174 = vmatprep.subr.mxu0 0.0
    %175 = vmatpush1.xpose.msra.mxu0 %v152
    %176 = vmatprep.subr.mxu0 0.0
    %177 = vmatpush1.xpose.msra.mxu0 %v153
    %178 = vmatprep.subr.mxu0 0.0
    %179 = vmatpush1.xpose.msra.mxu0 %v154
    %180 = vmatprep.subr.mxu0 0.0
    %181 = vmatpush1.xpose.msra.mxu0 %v155
    %182 = vmatprep.subr.mxu0 0.0
    %183 = vmatpush1.xpose.msra.mxu0 %v156
    %184 = vmatprep.subr.mxu0 0.0
    %185 = vmatpush1.xpose.msra.mxu0 %v157
    %186 = vmatprep.subr.mxu0 0.0
    %187 = vmatpush1.xpose.msra.mxu0 %v158
    %188 = vmatprep.subr.mxu0 0.0
    %189 = vmatpush1.xpose.msra.mxu0 %v159
    %190 = vmatprep.subr.mxu0 0.0
    %191 = vmatpush1.xpose.msra.mxu0 %v160
    %192 = vmatprep.subr.mxu0 0.0
    %193 = vmatpush1.xpose.msra.mxu0 %v161
    %194 = vmatprep.subr.mxu0 0.0
    %195 = vmatpush1.xpose.msra.mxu0 %v162
    %196 = vmatprep.subr.mxu0 0.0
    %197 = vmatpush1.xpose.msra.mxu0 0.0
    %198 = vmatprep.subr.mxu0 0.0
    %199 = vmatpush1.xpose.msra.mxu0 0.0
    %200 = vmatprep.subr.mxu0 0.0
    %201 = vmatpush1.xpose.msra.mxu0 0.0
    %202 = vmatprep.subr.mxu0 0.0
    %203 = vmatpush1.xpose.msra.mxu0 0.0
    %204 = vmatprep.subr.mxu0 0.0
    %205 = vmatpush1.xpose.msra.mxu0 0.0
    %206 = vmatprep.subr.mxu0 0.0
    %207 = vmatpush1.xpose.msra.mxu0 0.0
    %208 = vmatprep.subr.mxu0 0.0
    %209 = vmatpush1.xpose.msra.mxu0 0.0
    %210 = vmatprep.subr.mxu0 0.0
    %211 = vmatpush1.xpose.msra.mxu0 0.0
    %212 = vmatprep.subr.mxu0 0.0
    %213 = vmatpush1.xpose.msra.mxu0 0.0
    %214 = vmatprep.subr.mxu0 0.0
    %215 = vmatpush1.xpose.msra.mxu0 0.0
    %216 = vmatprep.subr.mxu0 0.0
    %217 = vmatpush1.xpose.msra.mxu0 0.0
    %218 = vmatprep.subr.mxu0 0.0
    %219 = vmatpush1.xpose.msra.mxu0 0.0
    %220 = vmatprep.subr.mxu0 0.0
    %221 = vmatpush1.xpose.msra.mxu0 0.0
    %222 = vmatprep.subr.mxu0 0.0
    %223 = vmatpush1.xpose.msra.mxu0 0.0
    %224 = vmatprep.subr.mxu0 0.0
    %225 = vmatpush1.xpose.msra.mxu0 0.0
    %226 = vmatprep.subr.mxu0 0.0
    %227 = vmatpush1.xpose.msra.mxu0 0.0
    %228 = vmatprep.mubr.f32.mxu0 0.0
    %229 = vmatmul.mubr.f32.gmra.mrb[0].mxu0 1.0
    %v230 = vpop.f32.mrb[0].mxu0
    %v231 = vadd.f32 0.0, %v230
    %v232 = vpop.f32.mrb[0].mxu0
    %233 = vdwg.mxu0
    %v234 = vadd.f32 %v163, %v231
    %235 = vst [vmem:[#allocation4] sm:$0x1] %v234
    // Predicated region
    $region26: #{tpu_custom_call.1} parent=1 // pred_check
      %p236 = pneg %p42
    $region27: #{tpu_custom_call.1} parent=1 // pred_check_branch
      %238 = sbr.rel (%p236) target = $region29
    $region28: #{tpu_custom_call.1} parent=1 // pred_region
      %s239 = sld [smem:[#allocation5]]
      %v240 = vld [vmem:[#allocation3] sm:$0xff]
      %v241 = vmax.f32 %v240, 1e-24
      %v242 = vrsqrt.pop %v241
      %v243 = vstv %s239
      %v244 = vmul.f32 %v243, %v242
      %v245 = vld [vmem:[#allocation4] sm:$0x1]
      %v246 = vmax.f32 %v245, 1e-24
      %v247 = vrsqrt.pop %v246
      %v248 = vld [vmem:[#allocation2] sm:$0xff]
      %250 = vset.pattern.permute.xlu0 0
      %251 = vperm.xlu0 %250, %v244
      %v252 = vpop.permute.xlu0 %251
      %v254 = vmul.f32 %v248, %v252
      %v256 = vlaneseq
      %v257 = vshrl.u32 %v256, 7
      %v258 = vsub.s32 0, %v257
      %v259 = vrot.slane %v247, %v258
      %v261 = vmul.f32 %v254, %v259
      %262 = vst [vmem:[#allocation11] sm:$0xff] %v261
    $region29: #{tpu_custom_call.1} parent=1 // pred_fallthru
      _
    // Predicated region
    $region30: #{tpu_custom_call.1} parent=1 // pred_check
      _
    $region31: #{tpu_custom_call.1} parent=1 // pred_check_branch
      %264 = sbr.rel (0) target = $region33
    $region32: #{tpu_custom_call.1} parent=1 // pred_region
      %s266 = ssub.s32 128, 128
      %267 = vsyncadd [#allocation8], %s266
      %s269 = sshll.u32 [#allocation11], 4
      %s270 = int_to_ptr.vmem [resolvable:$true] %s269
      %272 = dma.vmem_to_hbm [thread:$0]  %s270, 128, %s3, [#allocation8]
    $region33: #{tpu_custom_call.1} parent=1 // pred_fallthru
      _
    // Predicated region
    $region34: #{tpu_custom_call.1} parent=1 // pred_check
      _
    $region35: #{tpu_custom_call.1} parent=1 // pred_check_branch
      %274 = sbr.rel (0) target = $region37
    $region36: #{tpu_custom_call.1} parent=1 // pred_region
      %275 = dma.done [#allocation8], 128
    $region37: #{tpu_custom_call.1} parent=1 // pred_fallthru
      _
    %276 = vsyncpa [#allocation7], 1
    %277 = vsyncpa [#allocation10], 1
    %278 = vsyncpa [#allocation8], 1

</llo_original>
